<compile_context>
chip_gen: v5e
topology: v5e:2x2
jax: 0.10.0
libtpu: 0.0.40
codegen_flags: <defaults>
</compile_context>

<pallas_src>
import jax
import jax.numpy as jnp
from jax import lax
from jax.experimental import pallas as pl
from jax.experimental.pallas import tpu as pltpu

LANE = 128
# dtype of the large O(N^2 * feat) aggregation operands (bf16 is MXU-native on
# v5e/v6e/v7x and halves VMEM/HBM traffic); accumulation stays f32.
AGG_DTYPE = jnp.bfloat16


def _leaky_relu(x, slope=0.01):
    # torch.nn.functional.leaky_relu default negative_slope = 0.01
    return jnp.where(x > 0, x, slope * x)


# ---------------------------------------------------------------------------
# Kernel 1: node-level work (fused linears, attention projections, conv_x)
# ---------------------------------------------------------------------------
def node_kernel(s_ref, o_ref, afwd_ref, abwd_ref,
                ws2_w_ref, ws2_b_ref, wo4_w_ref, wo4_b_ref,
                a1_ref, a2_ref, wo_cat_ref, wo_b_ref,
                hss_ref, hos_ref, sss_ref, sos_ref, dsta_ref, x_ref):
    p = a1_ref.shape[1]
    sf = s_ref[...]                      # (Ns, ins)
    of = o_ref[...]                      # (No, ino)

    # fused s-side linears: [h_s | h_ss_src]  (one MXU push instead of two)
    hs2 = jnp.dot(sf, ws2_w_ref[...], preferred_element_type=jnp.float32) + ws2_b_ref[...]
    h_s = hs2[:, :p]
    h_ss_src = hs2[:, p:]

    # fused o-side linears: [h_os_src | h_in | h_self | h_out]
    ho4 = jnp.dot(of, wo4_w_ref[...], preferred_element_type=jnp.float32) + wo4_b_ref[...]
    h_os_src = ho4[:, :p]
    h_in = ho4[:, p:2 * p]
    h_self = ho4[:, 2 * p:3 * p]
    h_out = ho4[:, 3 * p:]

    # attention projections (computed once; the gridded edge kernel reuses them)
    a1 = a1_ref[...]
    a2 = a2_ref[...]
    sss_ref[...] = jnp.sum(h_ss_src * a1, axis=-1, keepdims=True)     # (Ns, 1)
    sos_ref[...] = jnp.sum(h_os_src * a1, axis=-1, keepdims=True)     # (No, 1)
    dsta_ref[...] = jnp.sum(h_s * a2, axis=-1, keepdims=True)         # (Ns, 1)

    hss_ref[...] = h_ss_src.astype(hss_ref.dtype)                     # bf16 for MXU agg
    hos_ref[...] = h_os_src.astype(hos_ref.dtype)

    # ---- conv_x: directed aggregation + relu + fused W_o ----
    dn = (((0,), (0,)), ((), ()))       # contract src axis -> per-dst sums
    h_in_agg = lax.dot_general(afwd_ref[...], h_in, dn, preferred_element_type=jnp.float32)
    h_out_agg = lax.dot_general(abwd_ref[...], h_out, dn, preferred_element_type=jnp.float32)
    r = jnp.concatenate([jnp.maximum(h_in_agg, 0.0),
                         jnp.maximum(h_self, 0.0),
                         jnp.maximum(h_out_agg, 0.0)], axis=-1)        # (No, 3p)
    x_ref[...] = (jnp.dot(r, wo_cat_ref[...], preferred_element_type=jnp.float32)
                  + wo_b_ref[...])


# ---------------------------------------------------------------------------
# Kernel 2: per-dst-tile edge attention + masked softmax + fused aggregation
# ---------------------------------------------------------------------------
def edge_softmax_agg_kernel(scal_ref, a_ss_ref, f_ss_ref, a_os_ref, f_os0_ref, f_os1_ref,
                            src_ss_ref, src_os_ref, dst_ref, h_big_ref, z_ref):
    wssf_a = scal_ref[0]                 # a1 . W_ss(f_ss) row        (SMEM scalars)
    wosf0_a = scal_ref[1]                # a1 . W_os(f_os[...,0]) row
    wosf1_a = scal_ref[2]                # a1 . W_os(f_os[...,1]) row
    dst = dst_ref[...]                   # (1, T)  = a2 . h_s(dst) + attn_b
    neg = jnp.float32(-1e30)

    # ---- ss edges: masked, max-subtracted softmax (per dst column) ----
    m_ss = a_ss_ref[...] > 0
    e_ss = _leaky_relu(src_ss_ref[...] + f_ss_ref[...] * wssf_a + dst)         # (Ns, T)
    mx_ss = jnp.max(jnp.where(m_ss, e_ss, neg), axis=0, keepdims=True)         # (1, T)
    p_ss = jnp.where(m_ss, jnp.exp(e_ss - mx_ss), 0.0)
    den_ss = jnp.sum(p_ss, axis=0, keepdims=True)
    inv_ss = pl.reciprocal(jnp.where(den_ss > 0, den_ss, 1.0), approx=True)    # EUP
    w_ss = p_ss * inv_ss                                                        # (Ns, T)

    # ---- os edges ----
    m_os = a_os_ref[...] > 0
    e_os = _leaky_relu(src_os_ref[...] + f_os0_ref[...] * wosf0_a
                       + f_os1_ref[...] * wosf1_a + dst)                        # (No, T)
    mx_os = jnp.max(jnp.where(m_os, e_os, neg), axis=0, keepdims=True)
    p_os = jnp.where(m_os, jnp.exp(e_os - mx_os), 0.0)
    den_os = jnp.sum(p_os, axis=0, keepdims=True)
    inv_os = pl.reciprocal(jnp.where(den_os > 0, den_os, 1.0), approx=True)
    w_os = p_os * inv_os

    # per-edge-feature contributions, folded as 3 extra K-rows of the fused dot
    fs_ss = jnp.sum(w_ss * f_ss_ref[...], axis=0, keepdims=True)                # (1, T)
    fs_os0 = jnp.sum(w_os * f_os0_ref[...], axis=0, keepdims=True)
    fs_os1 = jnp.sum(w_os * f_os1_ref[...], axis=0, keepdims=True)

    # single fused MXU aggregation: K = Ns + No + 3, bf16 operands, f32 accumulate
    w_cat = jnp.concatenate([w_ss, w_os, fs_ss, fs_os0, fs_os1],
                            axis=0).astype(h_big_ref.dtype)                     # (K, T)
    dn = (((0,), (0,)), ((), ()))
    z_ref[...] = lax.dot_general(w_cat, h_big_ref[...], dn,
                                 preferred_element_type=jnp.float32)            # (T, P)


# ---------------------------------------------------------------------------
# Wrapper
# ---------------------------------------------------------------------------
def _pad_last(w, p):
    pad = p - w.shape[-1]
    if pad == 0:
        return w
    return jnp.pad(w, [(0, 0)] * (w.ndim - 1) + [(0, pad)])


def attn_conv_layer(params, s_feat, o_feat, a_ss, f_ss, a_os, f_os, a_fwd, a_bwd,
                    t_dst=None):
    ns, ins = s_feat.shape
    no, ino = o_feat.shape
    out_dim = params['ws_w'].shape[1]
    p = ((out_dim + LANE - 1) // LANE) * LANE      # lane-dense padded feature width
    f32 = jnp.float32

    # ---- host-side weight packing / zero padding (O(params), negligible) ----
    ws_w = _pad_last(params['ws_w'], p)
    ws_b = _pad_last(params['ws_b'], p)
    wss_a = _pad_last(params['wss_w'][:ins], p)
    wss_f = _pad_last(params['wss_w'][ins:ins + 1], p)
    wss_b = _pad_last(params['wss_b'], p)
    wos_a = _pad_last(params['wos_w'][:ino], p)
    wos_f0 = _pad_last(params['wos_w'][ino:ino + 1], p)
    wos_f1 = _pad_last(params['wos_w'][ino + 1:ino + 2], p)
    wos_b = _pad_last(params['wos_b'], p)
    win_w = _pad_last(params['win_w'], p)
    win_b = _pad_last(params['win_b'], p)
    wself_w = _pad_last(params['wself_w'], p)
    wself_b = _pad_last(params['wself_b'], p)
    wout_w = _pad_last(params['wout_w'], p)
    wout_b = _pad_last(params['wout_b'], p)
    wo_b = _pad_last(params['wo_b'], p)

    a1 = _pad_last(params['attn_w'][:out_dim].reshape(1, out_dim), p)
    a2 = _pad_last(params['attn_w'][out_dim:].reshape(1, out_dim), p)
    ab = params['attn_b'][0, 0]

    wo_w = params['wo_w']
    wo_cat = jnp.concatenate(
        [jnp.pad(_pad_last(wo_w[k * out_dim:(k + 1) * out_dim], p),
                 ((0, p - out_dim), (0, 0))) for k in range(3)], axis=0)   # (3p, p)

    ws2_w = jnp.concatenate([ws_w, wss_a], axis=1)                          # (ins, 2p)
    ws2_b = jnp.concatenate([ws_b, wss_b], axis=1)
    wo4_w = jnp.concatenate([wos_a, win_w, wself_w, wout_w], axis=1)        # (ino, 4p)
    wo4_b = jnp.concatenate([wos_b, win_b, wself_b, wout_b], axis=1)

    vmem = lambda: pl.BlockSpec(memory_space=pltpu.MemorySpace.VMEM)

    # ---------------- call 1: node kernel (also computes conv_x) ----------------
    h_ss_src, h_os_src, src_ss, src_os, dst_col, x_pad = pl.pallas_call(
        node_kernel,
        out_shape=(
            jax.ShapeDtypeStruct((ns, p), AGG_DTYPE),   # h_ss_src
            jax.ShapeDtypeStruct((no, p), AGG_DTYPE),   # h_os_src
            jax.ShapeDtypeStruct((ns, 1), f32),         # a1 . h_ss_src
            jax.ShapeDtypeStruct((no, 1), f32),         # a1 . h_os_src
            jax.ShapeDtypeStruct((ns, 1), f32),         # a2 . h_s  (dst term)
            jax.ShapeDtypeStruct((no, p), f32),         # x (padded)
        ),
        in_specs=[vmem()] * 12,
        out_specs=tuple(vmem() for _ in range(6)),
    )(s_feat, o_feat, a_fwd, a_bwd, ws2_w, ws2_b, wo4_w, wo4_b, a1, a2, wo_cat, wo_b)

    # constants for the gridded edge kernel
    dst_row = dst_col.reshape(1, ns) + ab                                   # attn bias folded in
    h_big = jnp.concatenate([h_ss_src, h_os_src,
                             wss_f.astype(AGG_DTYPE),
                             wos_f0.astype(AGG_DTYPE),
                             wos_f1.astype(AGG_DTYPE)], axis=0)             # (ns+no+3, p)
    scal = jnp.concatenate([
        params['wss_w'][ins:ins + 1] @ params['attn_w'][:out_dim],
        params['wos_w'][ino:ino + 1] @ params['attn_w'][:out_dim],
        params['wos_w'][ino + 1:ino + 2] @ params['attn_w'][:out_dim],
    ], axis=0).reshape(3).astype(f32)

    f_os0 = f_os[..., 0]
    f_os1 = f_os[..., 1]

    if t_dst is None:
        # dst columns are independent (softmax reduces over src) -> tile + pipeline them.
        if ns <= 512:
            t_dst = ns
        else:
            t_dst = 512
            # TODO(synk): shrink t_dst for very large graphs so that
            #   (2*ns + 3*no) * t_dst * 4B * 2 (double-buffered) fits the scoped-VMEM budget
            #   (especially on v7x's 64 MiB physical VMEM).
    kdim = ns + no + 3

    z_pad = pl.pallas_call(
        edge_softmax_agg_kernel,
        out_shape=jax.ShapeDtypeStruct((ns, p), f32),
        grid=(pl.cdiv(ns, t_dst),),
        in_specs=[
            pl.BlockSpec(memory_space=pltpu.MemorySpace.SMEM),        # scal (3,)
            pl.BlockSpec((ns, t_dst), lambda i: (0, i)),              # a_ss
            pl.BlockSpec((ns, t_dst), lambda i: (0, i)),              # f_ss
            pl.BlockSpec((no, t_dst), lambda i: (0, i)),              # a_os
            pl.BlockSpec((no, t_dst), lambda i: (0, i)),              # f_os0
            pl.BlockSpec((no, t_dst), lambda i: (0, i)),              # f_os1
            pl.BlockSpec((ns, 1), lambda i: (0, 0)),                  # src_ss
            pl.BlockSpec((no, 1), lambda i: (0, 0)),                  # src_os
            pl.BlockSpec((1, t_dst), lambda i: (0, i)),               # dst_row
            pl.BlockSpec((kdim, p), lambda i: (0, 0)),                # h_big (constant)
        ],
        out_specs=pl.BlockSpec((t_dst, p), lambda i: (i, 0)),
        compiler_params=pltpu.CompilerParams(
            dimension_semantics=("parallel",),        # dst tiles independent (megacore)
            vmem_limit_bytes=32 * 1024 * 1024),
    )(scal, a_ss, f_ss, a_os, f_os0, f_os1, src_ss, src_os, dst_row, h_big)

    return z_pad[:, :out_dim], x_pad[:, :out_dim]


# ---------------------------------------------------------------------------
# Plain-JAX reference (faithful dense transcription of the torch/DGL forward)
# ---------------------------------------------------------------------------
def reference_forward(p, s_feat, o_feat, a_ss, f_ss, a_os, f_os, a_fwd, a_bwd):
    def leaky(x):
        return jnp.where(x > 0, x, 0.01 * x)

    ns, ins = s_feat.shape
    no, ino = o_feat.shape
    out_dim = p['ws_w'].shape[1]

    h_s = s_feat @ p['ws_w'] + p['ws_b']
    cat_ss = jnp.concatenate(
        [jnp.broadcast_to(s_feat[:, None, :], (ns, ns, ins)), f_ss[:, :, None]], axis=-1)
    h_ss = cat_ss @ p['wss_w'] + p['wss_b']
    cat_os = jnp.concatenate(
        [jnp.broadcast_to(o_feat[:, None, :], (no, ns, ino)), f_os], axis=-1)
    h_os = cat_os @ p['wos_w'] + p['wos_b']

    e_ss = leaky(jnp.concatenate(
        [h_ss, jnp.broadcast_to(h_s[None, :, :], (ns, ns, out_dim))], -1) @ p['attn_w']
        + p['attn_b'])[..., 0]
    e_os = leaky(jnp.concatenate(
        [h_os, jnp.broadcast_to(h_s[None, :, :], (no, ns, out_dim))], -1) @ p['attn_w']
        + p['attn_b'])[..., 0]

    exp_ss = a_ss * jnp.exp(e_ss)
    exp_os = a_os * jnp.exp(e_os)
    den_ss = jnp.where(jnp.sum(exp_ss, 0) > 0, jnp.sum(exp_ss, 0), 1.0)
    den_os = jnp.where(jnp.sum(exp_os, 0) > 0, jnp.sum(exp_os, 0), 1.0)
    z_ss = jnp.sum((exp_ss / den_ss[None, :])[..., None] * h_ss, axis=0)
    z_os = jnp.sum((exp_os / den_os[None, :])[..., None] * h_os, axis=0)
    z = z_ss + z_os

    h_in = o_feat @ p['win_w'] + p['win_b']
    h_self = o_feat @ p['wself_w'] + p['wself_b']
    h_out = o_feat @ p['wout_w'] + p['wout_b']
    h_in_agg = a_fwd.T @ h_in
    h_out_agg = a_bwd.T @ h_out
    x = jnp.maximum(jnp.concatenate([h_in_agg, h_self, h_out_agg], axis=1), 0.0) @ p['wo_w'] + p['wo_b']
    return z, x


if __name__ == "__main__":
    ins_dim, ino_dim, out_dim = 4, 6, 32
    num_s, num_o = 8, 8

    key = jax.random.PRNGKey(0)
    keys = jax.random.split(key, 24)
    ki = iter(range(24))

    def w(shape, scale=0.1):
        return (scale * jax.random.normal(keys[next(ki)], shape)).astype(jnp.float32)

    params = {
        'ws_w': w((ins_dim, out_dim)),       'ws_b': w((1, out_dim)),
        'wss_w': w((ins_dim + 1, out_dim)),  'wss_b': w((1, out_dim)),
        'wos_w': w((ino_dim + 2, out_dim)),  'wos_b': w((1, out_dim)),
        'attn_w': w((2 * out_dim, 1)),       'attn_b': w((1, 1)),
        'win_w': w((ino_dim, out_dim)),      'win_b': w((1, out_dim)),
        'wself_w': w((ino_dim, out_dim)),    'wself_b': w((1, out_dim)),
        'wout_w': w((ino_dim, out_dim)),     'wout_b': w((1, out_dim)),
        'wo_w': w((3 * out_dim, out_dim)),   'wo_b': w((1, out_dim)),
    }

    s_feat = jax.random.normal(keys[next(ki)], (num_s, ins_dim), jnp.float32)
    o_feat = jax.random.normal(keys[next(ki)], (num_o, ino_dim), jnp.float32)
    a_ss = jax.random.bernoulli(keys[next(ki)], 0.5, (num_s, num_s)).astype(jnp.float32)
    f_ss = jax.random.normal(keys[next(ki)], (num_s, num_s), jnp.float32)
    a_os = jax.random.bernoulli(keys[next(ki)], 0.5, (num_o, num_s)).astype(jnp.float32)
    f_os = jax.random.normal(keys[next(ki)], (num_o, num_s, 2), jnp.float32)
    a_fwd = jax.random.bernoulli(keys[next(ki)], 0.5, (num_o, num_o)).astype(jnp.float32)
    a_bwd = jax.random.bernoulli(keys[next(ki)], 0.5, (num_o, num_o)).astype(jnp.float32)

    z, x = attn_conv_layer(params, s_feat, o_feat, a_ss, f_ss, a_os, f_os, a_fwd, a_bwd)
    jax.block_until_ready((z, x))

    z_ref, x_ref = reference_forward(params, s_feat, o_feat, a_ss, f_ss, a_os, f_os, a_fwd, a_bwd)
    # z uses bf16 MXU aggregation + approx reciprocal -> bf16-level tolerance; x stays f32.
    assert jnp.allclose(z, z_ref, atol=2e-2, rtol=2e-2), "z mismatch"
    assert jnp.allclose(x, x_ref, atol=1e-4, rtol=1e-4), "x mismatch"

    print("KERNEL_OK")
</pallas_src>

<mosaic_0001>
module attributes {stable_mosaic.version = 11 : i64} {
  func.func @node_kernel(%arg0: memref<8x4xf32, #tpu.memory_space<vmem>>, %arg1: memref<8x6xf32, #tpu.memory_space<vmem>>, %arg2: memref<8x8xf32, #tpu.memory_space<vmem>>, %arg3: memref<8x8xf32, #tpu.memory_space<vmem>>, %arg4: memref<4x256xf32, #tpu.memory_space<vmem>>, %arg5: memref<1x256xf32, #tpu.memory_space<vmem>>, %arg6: memref<6x512xf32, #tpu.memory_space<vmem>>, %arg7: memref<1x512xf32, #tpu.memory_space<vmem>>, %arg8: memref<1x128xf32, #tpu.memory_space<vmem>>, %arg9: memref<1x128xf32, #tpu.memory_space<vmem>>, %arg10: memref<384x128xf32, #tpu.memory_space<vmem>>, %arg11: memref<1x128xf32, #tpu.memory_space<vmem>>, %arg12: memref<8x128xbf16, #tpu.memory_space<vmem>>, %arg13: memref<8x128xbf16, #tpu.memory_space<vmem>>, %arg14: memref<8x1xf32, #tpu.memory_space<vmem>>, %arg15: memref<8x1xf32, #tpu.memory_space<vmem>>, %arg16: memref<8x1xf32, #tpu.memory_space<vmem>>, %arg17: memref<8x128xf32, #tpu.memory_space<vmem>>) attributes {dimension_semantics = [], scalar_prefetch = 0 : i64, scratch_operands = 0 : i64, tpu.core_type = #tpu.core_type<tc>} {
    %c0 = arith.constant 0 : index
    %c0_0 = arith.constant 0 : index
    %0 = vector.load %arg0[%c0, %c0_0] : memref<8x4xf32, #tpu.memory_space<vmem>>, vector<8x4xf32>
    %c0_1 = arith.constant 0 : index
    %c0_2 = arith.constant 0 : index
    %1 = vector.load %arg1[%c0_1, %c0_2] : memref<8x6xf32, #tpu.memory_space<vmem>>, vector<8x6xf32>
    %c0_3 = arith.constant 0 : index
    %c0_4 = arith.constant 0 : index
    %2 = vector.load %arg4[%c0_3, %c0_4] : memref<4x256xf32, #tpu.memory_space<vmem>>, vector<4x256xf32>
    %cst = arith.constant dense<0.000000e+00> : vector<8x256xf32>
    %3 = tpu.matmul %0, %2, %cst {dimension_numbers = #tpu.dot_dimension_numbers<[1], [0], [0], [1], [0, 0, 1, 1], [], []>} : vector<8x4xf32>, vector<4x256xf32>, vector<8x256xf32> -> vector<8x256xf32>
    %c0_5 = arith.constant 0 : index
    %c0_6 = arith.constant 0 : index
    %4 = vector.load %arg5[%c0_5, %c0_6] : memref<1x256xf32, #tpu.memory_space<vmem>>, vector<1x256xf32>
    %5 = vector.broadcast %4 : vector<1x256xf32> to vector<8x256xf32>
    %6 = arith.addf %3, %5 : vector<8x256xf32>
    %7 = vector.extract_strided_slice %6 {offsets = [0, 0], sizes = [8, 128], strides = [1, 1]} : vector<8x256xf32> to vector<8x128xf32>
    %8 = vector.extract_strided_slice %6 {offsets = [0, 128], sizes = [8, 128], strides = [1, 1]} : vector<8x256xf32> to vector<8x128xf32>
    %c0_7 = arith.constant 0 : index
    %c0_8 = arith.constant 0 : index
    %9 = vector.load %arg6[%c0_7, %c0_8] : memref<6x512xf32, #tpu.memory_space<vmem>>, vector<6x512xf32>
    %cst_9 = arith.constant dense<0.000000e+00> : vector<8x512xf32>
    %10 = tpu.matmul %1, %9, %cst_9 {dimension_numbers = #tpu.dot_dimension_numbers<[1], [0], [0], [1], [0, 0, 1, 1], [], []>} : vector<8x6xf32>, vector<6x512xf32>, vector<8x512xf32> -> vector<8x512xf32>
    %c0_10 = arith.constant 0 : index
    %c0_11 = arith.constant 0 : index
    %11 = vector.load %arg7[%c0_10, %c0_11] : memref<1x512xf32, #tpu.memory_space<vmem>>, vector<1x512xf32>
    %12 = vector.broadcast %11 : vector<1x512xf32> to vector<8x512xf32>
    %13 = arith.addf %10, %12 : vector<8x512xf32>
    %14 = vector.extract_strided_slice %13 {offsets = [0, 0], sizes = [8, 128], strides = [1, 1]} : vector<8x512xf32> to vector<8x128xf32>
    %15 = vector.extract_strided_slice %13 {offsets = [0, 128], sizes = [8, 128], strides = [1, 1]} : vector<8x512xf32> to vector<8x128xf32>
    %16 = vector.extract_strided_slice %13 {offsets = [0, 256], sizes = [8, 128], strides = [1, 1]} : vector<8x512xf32> to vector<8x128xf32>
    %17 = vector.extract_strided_slice %13 {offsets = [0, 384], sizes = [8, 128], strides = [1, 1]} : vector<8x512xf32> to vector<8x128xf32>
    %c0_12 = arith.constant 0 : index
    %c0_13 = arith.constant 0 : index
    %18 = vector.load %arg8[%c0_12, %c0_13] : memref<1x128xf32, #tpu.memory_space<vmem>>, vector<1x128xf32>
    %c0_14 = arith.constant 0 : index
    %c0_15 = arith.constant 0 : index
    %19 = vector.load %arg9[%c0_14, %c0_15] : memref<1x128xf32, #tpu.memory_space<vmem>>, vector<1x128xf32>
    %20 = vector.broadcast %18 : vector<1x128xf32> to vector<8x128xf32>
    %21 = arith.mulf %8, %20 : vector<8x128xf32>
    %cst_16 = arith.constant dense<0.000000e+00> : vector<8xf32>
    %22 = vector.multi_reduction <add>, %21, %cst_16 [1] : vector<8x128xf32> to vector<8xf32>
    %23 = vector.shape_cast %22 : vector<8xf32> to vector<8x1xf32>
    %c0_17 = arith.constant 0 : index
    %c0_18 = arith.constant 0 : index
    %24 = vector.load %arg14[%c0_17, %c0_18] : memref<8x1xf32, #tpu.memory_space<vmem>>, vector<8x1xf32>
    tpu.vector_store %arg14[%c0_17, %c0_18], %23 {strides = array<i32>} : memref<8x1xf32, #tpu.memory_space<vmem>>, vector<8x1xf32>,
    %25 = vector.broadcast %18 : vector<1x128xf32> to vector<8x128xf32>
    %26 = arith.mulf %14, %25 : vector<8x128xf32>
    %cst_19 = arith.constant dense<0.000000e+00> : vector<8xf32>
    %27 = vector.multi_reduction <add>, %26, %cst_19 [1] : vector<8x128xf32> to vector<8xf32>
    %28 = vector.shape_cast %27 : vector<8xf32> to vector<8x1xf32>
    %c0_20 = arith.constant 0 : index
    %c0_21 = arith.constant 0 : index
    %29 = vector.load %arg15[%c0_20, %c0_21] : memref<8x1xf32, #tpu.memory_space<vmem>>, vector<8x1xf32>
    tpu.vector_store %arg15[%c0_20, %c0_21], %28 {strides = array<i32>} : memref<8x1xf32, #tpu.memory_space<vmem>>, vector<8x1xf32>,
    %30 = vector.broadcast %19 : vector<1x128xf32> to vector<8x128xf32>
    %31 = arith.mulf %7, %30 : vector<8x128xf32>
    %cst_22 = arith.constant dense<0.000000e+00> : vector<8xf32>
    %32 = vector.multi_reduction <add>, %31, %cst_22 [1] : vector<8x128xf32> to vector<8xf32>
    %33 = vector.shape_cast %32 : vector<8xf32> to vector<8x1xf32>
    %c0_23 = arith.constant 0 : index
    %c0_24 = arith.constant 0 : index
    %34 = vector.load %arg16[%c0_23, %c0_24] : memref<8x1xf32, #tpu.memory_space<vmem>>, vector<8x1xf32>
    tpu.vector_store %arg16[%c0_23, %c0_24], %33 {strides = array<i32>} : memref<8x1xf32, #tpu.memory_space<vmem>>, vector<8x1xf32>,
    %35 = arith.truncf %8 : vector<8x128xf32> to vector<8x128xbf16>
    %c0_25 = arith.constant 0 : index
    %c0_26 = arith.constant 0 : index
    %36 = vector.load %arg12[%c0_25, %c0_26] : memref<8x128xbf16, #tpu.memory_space<vmem>>, vector<8x128xbf16>
    tpu.vector_store %arg12[%c0_25, %c0_26], %35 {strides = array<i32>} : memref<8x128xbf16, #tpu.memory_space<vmem>>, vector<8x128xbf16>,
    %37 = arith.truncf %14 : vector<8x128xf32> to vector<8x128xbf16>
    %c0_27 = arith.constant 0 : index
    %c0_28 = arith.constant 0 : index
    %38 = vector.load %arg13[%c0_27, %c0_28] : memref<8x128xbf16, #tpu.memory_space<vmem>>, vector<8x128xbf16>
    tpu.vector_store %arg13[%c0_27, %c0_28], %37 {strides = array<i32>} : memref<8x128xbf16, #tpu.memory_space<vmem>>, vector<8x128xbf16>,
    %c0_29 = arith.constant 0 : index
    %c0_30 = arith.constant 0 : index
    %39 = vector.load %arg2[%c0_29, %c0_30] : memref<8x8xf32, #tpu.memory_space<vmem>>, vector<8x8xf32>
    %cst_31 = arith.constant dense<0.000000e+00> : vector<8x128xf32>
    %40 = tpu.matmul %39, %15, %cst_31 {dimension_numbers = #tpu.dot_dimension_numbers<[0], [0], [1], [1], [0, 1, 1, 1], [], []>} : vector<8x8xf32>, vector<8x128xf32>, vector<8x128xf32> -> vector<8x128xf32>
    %c0_32 = arith.constant 0 : index
    %c0_33 = arith.constant 0 : index
    %41 = vector.load %arg3[%c0_32, %c0_33] : memref<8x8xf32, #tpu.memory_space<vmem>>, vector<8x8xf32>
    %cst_34 = arith.constant dense<0.000000e+00> : vector<8x128xf32>
    %42 = tpu.matmul %41, %17, %cst_34 {dimension_numbers = #tpu.dot_dimension_numbers<[0], [0], [1], [1], [0, 1, 1, 1], [], []>} : vector<8x8xf32>, vector<8x128xf32>, vector<8x128xf32> -> vector<8x128xf32>
    %cst_35 = arith.constant 0.000000e+00 : f32
    %43 = vector.broadcast %cst_35 : f32 to vector<8x128xf32>
    %44 = arith.maximumf %40, %43 : vector<8x128xf32>
    %cst_36 = arith.constant 0.000000e+00 : f32
    %45 = vector.broadcast %cst_36 : f32 to vector<8x128xf32>
    %46 = arith.maximumf %16, %45 : vector<8x128xf32>
    %cst_37 = arith.constant 0.000000e+00 : f32
    %47 = vector.broadcast %cst_37 : f32 to vector<8x128xf32>
    %48 = arith.maximumf %42, %47 : vector<8x128xf32>
    %49 = tpu.concatenate %44, %46, %48 in 1 : vector<8x128xf32>, vector<8x128xf32>, vector<8x128xf32> -> vector<8x384xf32>
    %c0_38 = arith.constant 0 : index
    %c0_39 = arith.constant 0 : index
    %50 = vector.load %arg10[%c0_38, %c0_39] : memref<384x128xf32, #tpu.memory_space<vmem>>, vector<384x128xf32>
    %cst_40 = arith.constant dense<0.000000e+00> : vector<8x128xf32>
    %51 = tpu.matmul %49, %50, %cst_40 {dimension_numbers = #tpu.dot_dimension_numbers<[1], [0], [0], [1], [0, 0, 1, 1], [], []>} : vector<8x384xf32>, vector<384x128xf32>, vector<8x128xf32> -> vector<8x128xf32>
    %c0_41 = arith.constant 0 : index
    %c0_42 = arith.constant 0 : index
    %52 = vector.load %arg11[%c0_41, %c0_42] : memref<1x128xf32, #tpu.memory_space<vmem>>, vector<1x128xf32>
    %53 = vector.broadcast %52 : vector<1x128xf32> to vector<8x128xf32>
    %54 = arith.addf %51, %53 : vector<8x128xf32>
    %c0_43 = arith.constant 0 : index
    %c0_44 = arith.constant 0 : index
    %55 = vector.load %arg17[%c0_43, %c0_44] : memref<8x128xf32, #tpu.memory_space<vmem>>, vector<8x128xf32>
    tpu.vector_store %arg17[%c0_43, %c0_44], %54 {strides = array<i32>} : memref<8x128xf32, #tpu.memory_space<vmem>>, vector<8x128xf32>,
    return
  }
}

</mosaic_0001>

<llo_original>
// kernel: tpu_custom_call.1
$region0: #{tpu_custom_call.1}
  #allocation0 [shape = 'u32[]', space=smem, size = 0x4, offset = 0x4, fixed_abs, tag = 'smem constant byte address 0x4 - core index']
  #allocation1 [shape = 'u32[72,128]{1,0:T(1,128)}', space=vmem, size = 0x9000, scoped, tag = 'internal scratch']
  %s0 = inlined_call_operand.vmem [shape: f32[8,4], index: 0, kind: input, shape index: {}]
  %s1 = inlined_call_operand.vmem [shape: f32[8,6], index: 1, kind: input, shape index: {}]
  %s2 = inlined_call_operand.hbm [shape: f32[8,8], index: 2, kind: input, shape index: {}]
  %s3 = inlined_call_operand.hbm [shape: f32[8,8], index: 3, kind: input, shape index: {}]
  %s4 = inlined_call_operand.hbm [shape: f32[4,256], index: 4, kind: input, shape index: {}]
  %s5 = inlined_call_operand.vmem [shape: f32[1,256], index: 5, kind: input, shape index: {}]
  %s6 = inlined_call_operand.hbm [shape: f32[6,512], index: 6, kind: input, shape index: {}]
  %s7 = inlined_call_operand.vmem [shape: f32[1,512], index: 7, kind: input, shape index: {}]
  %s8 = inlined_call_operand.vmem [shape: f32[1,128], index: 8, kind: input, shape index: {}]
  %s9 = inlined_call_operand.vmem [shape: f32[1,128], index: 9, kind: input, shape index: {}]
  %s10 = inlined_call_operand.hbm [shape: f32[384,128], index: 10, kind: input, shape index: {}]
  %s11 = inlined_call_operand.vmem [shape: f32[1,128], index: 11, kind: input, shape index: {}]
  %s12 = inlined_call_operand.hbm [shape: bf16[8,128], index: 12, kind: output, shape index: {0}]
  %s13 = inlined_call_operand.hbm [shape: bf16[8,128], index: 13, kind: output, shape index: {1}]
  %s14 = inlined_call_operand.vmem [shape: f32[8,1], index: 14, kind: output, shape index: {2}]
  %s15 = inlined_call_operand.vmem [shape: f32[8,1], index: 15, kind: output, shape index: {3}]
  %s16 = inlined_call_operand.vmem [shape: f32[8,1], index: 16, kind: output, shape index: {4}]
  %s17 = inlined_call_operand.hbm [shape: f32[8,128], index: 17, kind: output, shape index: {5}]
  %18 = xla_tuple %s12, %s13, %s14, %s15, %s16, %s17
  %s19 = sld [smem:[#allocation0]]
  $region118: #{tpu_custom_call.1} parent=0
    _
  %s21 = ssub.s32 1, %s19
  %s22 = scalar_select 0, %s21, %s19
  $region1: #{tpu_custom_call.1} parent=0
    #allocation2 [shape = 'u8[4096]{0}', space=vmem, size = 0x1000, scoped, tag = 'input window, operand 2, single buffered']
    #allocation3 [shape = 's32[1]{0}', space=sflag, size = 0x4, scoped, tag = 'scoped memory for tpu_custom_call.1']
    #allocation4 [shape = 's32[1]{0}', space=sflag, size = 0x4, scoped, tag = 'scoped memory for tpu_custom_call.1']
    #allocation5 [shape = 'u8[4096]{0}', space=vmem, size = 0x1000, scoped, tag = 'input window, operand 3, single buffered']
    #allocation6 [shape = 's32[1]{0}', space=sflag, size = 0x4, scoped, tag = 'scoped memory for tpu_custom_call.1']
    #allocation7 [shape = 'u8[4096]{0}', space=vmem, size = 0x1000, scoped, tag = 'input window, operand 4, single buffered']
    #allocation8 [shape = 'u8[16384]{0}', space=vmem, size = 0x4000, scoped, tag = 'input window, operand 6, single buffered']
    #allocation9 [shape = 's32[1]{0}', space=sflag, size = 0x4, scoped, tag = 'scoped memory for tpu_custom_call.1']
    #allocation10 [shape = 'u8[196608]{0}', space=vmem, size = 0x30000, scoped, tag = 'input window, operand 10, single buffered']
    #allocation11 [shape = 'u8[2048]{0}', space=vmem, size = 0x800, scoped, tag = 'output window, operand 0, single buffered']
    #allocation12 [shape = 'u8[2048]{0}', space=vmem, size = 0x800, scoped, tag = 'output window, operand 1, single buffered']
    #allocation13 [shape = 's32[1]{0}', space=sflag, size = 0x4, scoped, tag = 'scoped memory for tpu_custom_call.1']
    #allocation14 [shape = 'u8[4096]{0}', space=vmem, size = 0x1000, scoped, tag = 'output window, operand 5, single buffered']
    %23 = vsyncpa [#allocation3], 0
    %24 = vsyncpa [#allocation6], 0
    %25 = vsyncpa [#allocation9], 0
    %26 = vsyncpa [#allocation4], 0
    %27 = vsyncpa [#allocation13], 0
    // Predicated region
    $region2: #{tpu_custom_call.1} parent=1 // pred_check
      _
    $region3: #{tpu_custom_call.1} parent=1 // pred_check_branch
      %29 = sbr.rel (0) target = $region5
    $region4: #{tpu_custom_call.1} parent=1 // pred_region
      _
    $region5: #{tpu_custom_call.1} parent=1 // pred_fallthru
      _
    // Predicated region
    $region6: #{tpu_custom_call.1} parent=1 // pred_check
      _
    $region7: #{tpu_custom_call.1} parent=1 // pred_check_branch
      %31 = sbr.rel (0) target = $region9
    $region8: #{tpu_custom_call.1} parent=1 // pred_region
      _
    $region9: #{tpu_custom_call.1} parent=1 // pred_fallthru
      _
    // Predicated region
    $region10: #{tpu_custom_call.1} parent=1 // pred_check
      _
    $region11: #{tpu_custom_call.1} parent=1 // pred_check_branch
      %33 = sbr.rel (0) target = $region13
    $region12: #{tpu_custom_call.1} parent=1 // pred_region
      %35 = vsyncadd [#allocation3], 0
      %s37 = sshll.u32 %s2, 4
      %s38 = int_to_ptr.hbm [resolvable:$true] %s37
      %s39 = sshll.u32 [#allocation2], 4
      %s40 = int_to_ptr.vmem [resolvable:$true] %s39
      %42 = dma.hbm_to_vmem [thread:$0]  %s38, 128, %s40, [#allocation3]
    $region13: #{tpu_custom_call.1} parent=1 // pred_fallthru
      _
    // Predicated region
    $region14: #{tpu_custom_call.1} parent=1 // pred_check
      _
    $region15: #{tpu_custom_call.1} parent=1 // pred_check_branch
      %44 = sbr.rel (0) target = $region17
    $region16: #{tpu_custom_call.1} parent=1 // pred_region
      %46 = vsyncadd [#allocation6], 0
      %s48 = sshll.u32 %s3, 4
      %s49 = int_to_ptr.hbm [resolvable:$true] %s48
      %s50 = sshll.u32 [#allocation5], 4
      %s51 = int_to_ptr.vmem [resolvable:$true] %s50
      %53 = dma.hbm_to_vmem [thread:$0]  %s49, 128, %s51, [#allocation6]
    $region17: #{tpu_custom_call.1} parent=1 // pred_fallthru
      _
    // Predicated region
    $region18: #{tpu_custom_call.1} parent=1 // pred_check
      _
    $region19: #{tpu_custom_call.1} parent=1 // pred_check_branch
      %55 = sbr.rel (0) target = $region21
    $region20: #{tpu_custom_call.1} parent=1 // pred_region
      %57 = vsyncadd [#allocation6], 0
      %s59 = sshll.u32 %s4, 4
      %s60 = int_to_ptr.hbm [resolvable:$true] %s59
      %s61 = sshll.u32 [#allocation7], 4
      %s62 = int_to_ptr.vmem [resolvable:$true] %s61
      %64 = dma.hbm_to_vmem [thread:$0]  %s60, 128, %s62, [#allocation6]
    $region21: #{tpu_custom_call.1} parent=1 // pred_fallthru
      _
    // Predicated region
    $region22: #{tpu_custom_call.1} parent=1 // pred_check
      _
    $region23: #{tpu_custom_call.1} parent=1 // pred_check_branch
      %66 = sbr.rel (0) target = $region25
    $region24: #{tpu_custom_call.1} parent=1 // pred_region
      _
    $region25: #{tpu_custom_call.1} parent=1 // pred_fallthru
      _
    // Predicated region
    $region26: #{tpu_custom_call.1} parent=1 // pred_check
      _
    $region27: #{tpu_custom_call.1} parent=1 // pred_check_branch
      %68 = sbr.rel (0) target = $region29
    $region28: #{tpu_custom_call.1} parent=1 // pred_region
      %70 = vsyncadd [#allocation9], 0
      %s72 = sshll.u32 %s6, 4
      %s73 = int_to_ptr.hbm [resolvable:$true] %s72
      %s74 = sshll.u32 [#allocation8], 4
      %s75 = int_to_ptr.vmem [resolvable:$true] %s74
      %77 = dma.hbm_to_vmem [thread:$0]  %s73, 512, %s75, [#allocation9]
    $region29: #{tpu_custom_call.1} parent=1 // pred_fallthru
      _
    // Predicated region
    $region30: #{tpu_custom_call.1} parent=1 // pred_check
      _
    $region31: #{tpu_custom_call.1} parent=1 // pred_check_branch
      %79 = sbr.rel (0) target = $region33
    $region32: #{tpu_custom_call.1} parent=1 // pred_region
      _
    $region33: #{tpu_custom_call.1} parent=1 // pred_fallthru
      _
    // Predicated region
    $region34: #{tpu_custom_call.1} parent=1 // pred_check
      _
    $region35: #{tpu_custom_call.1} parent=1 // pred_check_branch
      %81 = sbr.rel (0) target = $region37
    $region36: #{tpu_custom_call.1} parent=1 // pred_region
      _
    $region37: #{tpu_custom_call.1} parent=1 // pred_fallthru
      _
    // Predicated region
    $region38: #{tpu_custom_call.1} parent=1 // pred_check
      _
    $region39: #{tpu_custom_call.1} parent=1 // pred_check_branch
      %83 = sbr.rel (0) target = $region41
    $region40: #{tpu_custom_call.1} parent=1 // pred_region
      _
    $region41: #{tpu_custom_call.1} parent=1 // pred_fallthru
      _
    // Predicated region
    $region42: #{tpu_custom_call.1} parent=1 // pred_check
      _
    $region43: #{tpu_custom_call.1} parent=1 // pred_check_branch
      %85 = sbr.rel (0) target = $region45
    $region44: #{tpu_custom_call.1} parent=1 // pred_region
      %87 = vsyncadd [#allocation9], 0
      %s88 = sshll.u32 %s10, 4
      %s89 = int_to_ptr.hbm [resolvable:$true] %s88
      %s90 = sshll.u32 [#allocation10], 4
      %s91 = int_to_ptr.vmem [resolvable:$true] %s90
      %96 = dma.hbm_to_vmem [thread:$0]  %s89, 6144, %s91, [#allocation9], 128, 128, 8
    $region45: #{tpu_custom_call.1} parent=1 // pred_fallthru
      _
    // Predicated region
    $region46: #{tpu_custom_call.1} parent=1 // pred_check
      _
    $region47: #{tpu_custom_call.1} parent=1 // pred_check_branch
      %98 = sbr.rel (0) target = $region49
    $region48: #{tpu_custom_call.1} parent=1 // pred_region
      _
    $region49: #{tpu_custom_call.1} parent=1 // pred_fallthru
      _
    // Predicated region
    $region50: #{tpu_custom_call.1} parent=1 // pred_check
      _
    $region51: #{tpu_custom_call.1} parent=1 // pred_check_branch
      %100 = sbr.rel (0) target = $region53
    $region52: #{tpu_custom_call.1} parent=1 // pred_region
      %102 = dma.done [#allocation3], 128
    $region53: #{tpu_custom_call.1} parent=1 // pred_fallthru
      _
    // Predicated region
    $region54: #{tpu_custom_call.1} parent=1 // pred_check
      _
    $region55: #{tpu_custom_call.1} parent=1 // pred_check_branch
      %104 = sbr.rel (0) target = $region57
    $region56: #{tpu_custom_call.1} parent=1 // pred_region
      %106 = dma.done [#allocation6], 128
    $region57: #{tpu_custom_call.1} parent=1 // pred_fallthru
      _
    // Predicated region
    $region58: #{tpu_custom_call.1} parent=1 // pred_check
      _
    $region59: #{tpu_custom_call.1} parent=1 // pred_check_branch
      %108 = sbr.rel (0) target = $region61
    $region60: #{tpu_custom_call.1} parent=1 // pred_region
      %110 = dma.done [#allocation6], 128
    $region61: #{tpu_custom_call.1} parent=1 // pred_fallthru
      _
    // Predicated region
    $region62: #{tpu_custom_call.1} parent=1 // pred_check
      _
    $region63: #{tpu_custom_call.1} parent=1 // pred_check_branch
      %112 = sbr.rel (0) target = $region65
    $region64: #{tpu_custom_call.1} parent=1 // pred_region
      %114 = dma.done [#allocation9], 512
    $region65: #{tpu_custom_call.1} parent=1 // pred_fallthru
      _
    // Predicated region
    $region66: #{tpu_custom_call.1} parent=1 // pred_check
      _
    $region67: #{tpu_custom_call.1} parent=1 // pred_check_branch
      %116 = sbr.rel (0) target = $region69
    $region68: #{tpu_custom_call.1} parent=1 // pred_region
      %118 = dma.done [#allocation9], 6144
    $region69: #{tpu_custom_call.1} parent=1 // pred_fallthru
      _
    %v119 = vld [vmem:[%s0] sm:$0xff]
    %v120 = vld [vmem:[%s1] sm:$0xff]
    %v121 = vld [vmem:[#allocation7] sm:$0xff]
    %v122 = vld [vmem:[%s5] sm:$0x3]
    %v124 = vperm.slane %v122, 0
    %v125 = vperm.slane %v122, 1
    %129 = vst [vmem:[#allocation1] ss:$2 sm:$0xff] %v121
    %v130 = vld.sshfl [vmem:[#allocation1] sm:$0xff pattern:$0x75316420]
    %v131 = vld.sshfl [vmem:[#allocation1 + $0x8] sm:$0xff pattern:$0x75316420]
    %vm132 = vcmask 31744
    %v134 = vsel %vm132, %v119, 0
    %vm136 = vcmask 1043456
    %v137 = vsel %vm136, %v130, 0
    %v139 = vsel %vm136, %v131, 0
    %141 = vmatpush.msra.mxu0 0.0
    %142 = vmatpush.msra.mxu0 0.0
    %143 = vmatpush.msra.mxu0 0.0
    %144 = vmatpush.msra.mxu0 0.0
    %145 = vmatpush.msra.mxu0 0.0
    %146 = vmatpush.msra.mxu0 0.0
    %147 = vmatpush.msra.mxu0 0.0
    %148 = vmatpush.msra.mxu0 0.0
    %149 = vmatpush.msra.mxu0 0.0
    %150 = vmatpush.msra.mxu0 0.0
    %151 = vmatpush.msra.mxu0 0.0
    %152 = vmatpush.msra.mxu0 0.0
    %153 = vmatpush.msra.mxu0 0.0
    %154 = vmatpush.msra.mxu0 0.0
    %155 = vmatpush.msra.mxu0 0.0
    %156 = vmatpush.msra.mxu0 %v137
    %157 = vmatmul.f32.gmra.mxu0 %v134
    %v158 = vpop.f32.mrf.mxu0
    %v159 = vadd.f32 %v124, %v158
    %160 = vdwg.mxu0
    %161 = vmatpush.msra.mxu0 0.0
    %162 = vmatpush.msra.mxu0 0.0
    %163 = vmatpush.msra.mxu0 0.0
    %164 = vmatpush.msra.mxu0 0.0
    %165 = vmatpush.msra.mxu0 0.0
    %166 = vmatpush.msra.mxu0 0.0
    %167 = vmatpush.msra.mxu0 0.0
    %168 = vmatpush.msra.mxu0 0.0
    %169 = vmatpush.msra.mxu0 0.0
    %170 = vmatpush.msra.mxu0 0.0
    %171 = vmatpush.msra.mxu0 0.0
    %172 = vmatpush.msra.mxu0 0.0
    %173 = vmatpush.msra.mxu0 0.0
    %174 = vmatpush.msra.mxu0 0.0
    %175 = vmatpush.msra.mxu0 0.0
    %176 = vmatpush.msra.mxu0 %v139
    %177 = vmatmul.f32.gmra.mxu0 %v134
    %v178 = vpop.f32.mrf.mxu0
    %v179 = vadd.f32 %v125, %v178
    %180 = vdwg.mxu0
    %v181 = vld [vmem:[#allocation8] sm:$0x3f]
    %v182 = vld [vmem:[#allocation8 + $0x8] sm:$0x3f]
    %v183 = vld [vmem:[#allocation8 + $0x10] sm:$0x3f]
    %v184 = vld [vmem:[#allocation8 + $0x18] sm:$0x3f]
    %v185 = vld [vmem:[%s7] sm:$0xf]
    %v187 = vperm.slane %v185, 0
    %v188 = vperm.slane %v185, 1
    %v189 = vperm.slane %v185, 2
    %v190 = vperm.slane %v185, 3
    %vm195 = vcmask 48128
    %v197 = vsel %vm195, %v120, 0
    %vm199 = vcmask 1045504
    %v201 = vsel %vm199, %v181, 0
    %v204 = vsel %vm199, %v182, 0
    %v207 = vsel %vm199, %v183, 0
    %v210 = vsel %vm199, %v184, 0
    %212 = vmatpush.msra.mxu0 0.0
    %213 = vmatpush.msra.mxu0 0.0
    %214 = vmatpush.msra.mxu0 0.0
    %215 = vmatpush.msra.mxu0 0.0
    %216 = vmatpush.msra.mxu0 0.0
    %217 = vmatpush.msra.mxu0 0.0
    %218 = vmatpush.msra.mxu0 0.0
    %219 = vmatpush.msra.mxu0 0.0
    %220 = vmatpush.msra.mxu0 0.0
    %221 = vmatpush.msra.mxu0 0.0
    %222 = vmatpush.msra.mxu0 0.0
    %223 = vmatpush.msra.mxu0 0.0
    %224 = vmatpush.msra.mxu0 0.0
    %225 = vmatpush.msra.mxu0 0.0
    %226 = vmatpush.msra.mxu0 0.0
    %227 = vmatpush.msra.mxu0 %v201
    %228 = vmatmul.f32.gmra.mxu0 %v197
    %v229 = vpop.f32.mrf.mxu0
    %v230 = vadd.f32 %v187, %v229
    %231 = vdwg.mxu0
    %232 = vmatpush.msra.mxu0 0.0
    %233 = vmatpush.msra.mxu0 0.0
    %234 = vmatpush.msra.mxu0 0.0
    %235 = vmatpush.msra.mxu0 0.0
    %236 = vmatpush.msra.mxu0 0.0
    %237 = vmatpush.msra.mxu0 0.0
    %238 = vmatpush.msra.mxu0 0.0
    %239 = vmatpush.msra.mxu0 0.0
    %240 = vmatpush.msra.mxu0 0.0
    %241 = vmatpush.msra.mxu0 0.0
    %242 = vmatpush.msra.mxu0 0.0
    %243 = vmatpush.msra.mxu0 0.0
    %244 = vmatpush.msra.mxu0 0.0
    %245 = vmatpush.msra.mxu0 0.0
    %246 = vmatpush.msra.mxu0 0.0
    %247 = vmatpush.msra.mxu0 %v204
    %248 = vmatmul.f32.gmra.mxu0 %v197
    %v249 = vpop.f32.mrf.mxu0
    %v250 = vadd.f32 %v188, %v249
    %251 = vdwg.mxu0
    %252 = vmatpush.msra.mxu0 0.0
    %253 = vmatpush.msra.mxu0 0.0
    %254 = vmatpush.msra.mxu0 0.0
    %255 = vmatpush.msra.mxu0 0.0
    %256 = vmatpush.msra.mxu0 0.0
    %257 = vmatpush.msra.mxu0 0.0
    %258 = vmatpush.msra.mxu0 0.0
    %259 = vmatpush.msra.mxu0 0.0
    %260 = vmatpush.msra.mxu0 0.0
    %261 = vmatpush.msra.mxu0 0.0
    %262 = vmatpush.msra.mxu0 0.0
    %263 = vmatpush.msra.mxu0 0.0
    %264 = vmatpush.msra.mxu0 0.0
    %265 = vmatpush.msra.mxu0 0.0
    %266 = vmatpush.msra.mxu0 0.0
    %267 = vmatpush.msra.mxu0 %v207
    %268 = vmatmul.f32.gmra.mxu0 %v197
    %v269 = vpop.f32.mrf.mxu0
    %v270 = vadd.f32 %v189, %v269
    %271 = vdwg.mxu0
    %272 = vmatpush.msra.mxu0 0.0
    %273 = vmatpush.msra.mxu0 0.0
    %274 = vmatpush.msra.mxu0 0.0
    %275 = vmatpush.msra.mxu0 0.0
    %276 = vmatpush.msra.mxu0 0.0
    %277 = vmatpush.msra.mxu0 0.0
    %278 = vmatpush.msra.mxu0 0.0
    %279 = vmatpush.msra.mxu0 0.0
    %280 = vmatpush.msra.mxu0 0.0
    %281 = vmatpush.msra.mxu0 0.0
    %282 = vmatpush.msra.mxu0 0.0
    %283 = vmatpush.msra.mxu0 0.0
    %284 = vmatpush.msra.mxu0 0.0
    %285 = vmatpush.msra.mxu0 0.0
    %286 = vmatpush.msra.mxu0 0.0
    %287 = vmatpush.msra.mxu0 %v210
    %288 = vmatmul.f32.gmra.mxu0 %v197
    %v289 = vpop.f32.mrf.mxu0
    %v290 = vadd.f32 %v190, %v289
    %291 = vdwg.mxu0
    %v292 = vld [vmem:[%s8] sm:$0x1]
    %v293 = vld [vmem:[%s9] sm:$0x1]
    %v295 = vperm.slane %v292, 0
    %v297 = vmul.f32 %v179, %v295
    %298 = vadd.xlane.f32.xlu0 %v297
    %v299 = vpop.xlane.xlu0 %298
    %vm300 = vcmask 7168
    %301 = vst.msk [vmem:[%s14] sm:$0xff] %vm300, %v299
    %v302 = vmul.f32 %v230, %v295
    %303 = vadd.xlane.f32.xlu0 %v302
    %v304 = vpop.xlane.xlu0 %303
    %305 = vst.msk [vmem:[%s15] sm:$0xff] %vm300, %v304
    %v307 = vperm.slane %v293, 0
    %v309 = vmul.f32 %v159, %v307
    %310 = vadd.xlane.f32.xlu0 %v309
    %v311 = vpop.xlane.xlu0 %310
    %312 = vst.msk [vmem:[%s16] sm:$0xff] %vm300, %v311
    %v313 = vpack.c.bf16 %v179, %v179
    %314 = vst [vmem:[#allocation11] sm:$0xf] %v313
    %v315 = vpack.c.bf16 %v230, %v230
    %316 = vst [vmem:[#allocation12] sm:$0xf] %v315
    %v317 = vld [vmem:[#allocation2] sm:$0xff]
    %318 = vxpose.xlu0.b32.start [1/16] %v317, 128
    %319 = vxpose.xlu0.b32.cont [2/16] 0.0, 128
    %320 = vxpose.xlu0.b32.cont [3/16] 0.0, 128
    %321 = vxpose.xlu0.b32.cont [4/16] 0.0, 128
    %322 = vxpose.xlu0.b32.cont [5/16] 0.0, 128
    %323 = vxpose.xlu0.b32.cont [6/16] 0.0, 128
    %324 = vxpose.xlu0.b32.cont [7/16] 0.0, 128
    %325 = vxpose.xlu0.b32.cont [8/16] 0.0, 128
    %326 = vxpose.xlu0.b32.cont [9/16] 0.0, 128
    %327 = vxpose.xlu0.b32.cont [10/16] 0.0, 128
    %328 = vxpose.xlu0.b32.cont [11/16] 0.0, 128
    %329 = vxpose.xlu0.b32.cont [12/16] 0.0, 128
    %330 = vxpose.xlu0.b32.cont [13/16] 0.0, 128
    %331 = vxpose.xlu0.b32.cont [14/16] 0.0, 128
    %332 = vxpose.xlu0.b32.cont [15/16] 0.0, 128
    %333 = vxpose.xlu0.b32.end [16/16] 0.0, 128
    %v334 = vpop.trf.xlu0
    %v335 = vpop.trf.xlu0
    %v336 = vpop.trf.xlu0
    %v337 = vpop.trf.xlu0
    %v338 = vpop.trf.xlu0
    %v339 = vpop.trf.xlu0
    %v340 = vpop.trf.xlu0
    %v341 = vpop.trf.xlu0
    %v342 = vpop.trf.xlu0
    %v343 = vpop.trf.xlu0
    %v344 = vpop.trf.xlu0
    %v345 = vpop.trf.xlu0
    %v346 = vpop.trf.xlu0
    %v347 = vpop.trf.xlu0
    %v348 = vpop.trf.xlu0
    %v349 = vpop.trf.xlu0
    %vm350 = vcmask 64512
    %v352 = vsel %vm350, %v334, 0
    %354 = vmatpush.msra.mxu0 0.0
    %355 = vmatpush.msra.mxu0 0.0
    %356 = vmatpush.msra.mxu0 0.0
    %357 = vmatpush.msra.mxu0 0.0
    %358 = vmatpush.msra.mxu0 0.0
    %359 = vmatpush.msra.mxu0 0.0
    %360 = vmatpush.msra.mxu0 0.0
    %361 = vmatpush.msra.mxu0 0.0
    %362 = vmatpush.msra.mxu0 0.0
    %363 = vmatpush.msra.mxu0 0.0
    %364 = vmatpush.msra.mxu0 0.0
    %365 = vmatpush.msra.mxu0 0.0
    %366 = vmatpush.msra.mxu0 0.0
    %367 = vmatpush.msra.mxu0 0.0
    %368 = vmatpush.msra.mxu0 0.0
    %369 = vmatpush.msra.mxu0 %v250
    %370 = vmatmul.f32.gmra.mxu0 %v352
    %v371 = vpop.f32.mrf.mxu0
    %v372 = vadd.f32 0.0, %v371
    %373 = vdwg.mxu0
    %v374 = vld [vmem:[#allocation5] sm:$0xff]
    %375 = vxpose.xlu0.b32.start [1/16] %v374, 128
    %376 = vxpose.xlu0.b32.cont [2/16] 0.0, 128
    %377 = vxpose.xlu0.b32.cont [3/16] 0.0, 128
    %378 = vxpose.xlu0.b32.cont [4/16] 0.0, 128
    %379 = vxpose.xlu0.b32.cont [5/16] 0.0, 128
    %380 = vxpose.xlu0.b32.cont [6/16] 0.0, 128
    %381 = vxpose.xlu0.b32.cont [7/16] 0.0, 128
    %382 = vxpose.xlu0.b32.cont [8/16] 0.0, 128
    %383 = vxpose.xlu0.b32.cont [9/16] 0.0, 128
    %384 = vxpose.xlu0.b32.cont [10/16] 0.0, 128
    %385 = vxpose.xlu0.b32.cont [11/16] 0.0, 128
    %386 = vxpose.xlu0.b32.cont [12/16] 0.0, 128
    %387 = vxpose.xlu0.b32.cont [13/16] 0.0, 128
    %388 = vxpose.xlu0.b32.cont [14/16] 0.0, 128
    %389 = vxpose.xlu0.b32.cont [15/16] 0.0, 128
    %390 = vxpose.xlu0.b32.end [16/16] 0.0, 128
    %v391 = vpop.trf.xlu0
    %v392 = vpop.trf.xlu0
    %v393 = vpop.trf.xlu0
    %v394 = vpop.trf.xlu0
    %v395 = vpop.trf.xlu0
    %v396 = vpop.trf.xlu0
    %v397 = vpop.trf.xlu0
    %v398 = vpop.trf.xlu0
    %v399 = vpop.trf.xlu0
    %v400 = vpop.trf.xlu0
    %v401 = vpop.trf.xlu0
    %v402 = vpop.trf.xlu0
    %v403 = vpop.trf.xlu0
    %v404 = vpop.trf.xlu0
    %v405 = vpop.trf.xlu0
    %v406 = vpop.trf.xlu0
    %v408 = vsel %vm350, %v391, 0
    %410 = vmatpush.msra.mxu0 0.0
    %411 = vmatpush.msra.mxu0 0.0
    %412 = vmatpush.msra.mxu0 0.0
    %413 = vmatpush.msra.mxu0 0.0
    %414 = vmatpush.msra.mxu0 0.0
    %415 = vmatpush.msra.mxu0 0.0
    %416 = vmatpush.msra.mxu0 0.0
    %417 = vmatpush.msra.mxu0 0.0
    %418 = vmatpush.msra.mxu0 0.0
    %419 = vmatpush.msra.mxu0 0.0
    %420 = vmatpush.msra.mxu0 0.0
    %421 = vmatpush.msra.mxu0 0.0
    %422 = vmatpush.msra.mxu0 0.0
    %423 = vmatpush.msra.mxu0 0.0
    %424 = vmatpush.msra.mxu0 0.0
    %425 = vmatpush.msra.mxu0 %v290
    %426 = vmatmul.f32.gmra.mxu0 %v408
    %v427 = vpop.f32.mrf.mxu0
    %v428 = vadd.f32 0.0, %v427
    %429 = vdwg.mxu0
    %v430 = vmax.f32 %v372, 0.0
    %v431 = vmax.f32 %v270, 0.0
    %v432 = vmax.f32 %v428, 0.0
    %v433 = vld [vmem:[#allocation10] sm:$0xff]
    %v434 = vld [vmem:[#allocation10 + $0x8] sm:$0xff]
    %v435 = vld [vmem:[#allocation10 + $0x10] sm:$0xff]
    %v436 = vld [vmem:[#allocation10 + $0x18] sm:$0xff]
    %v437 = vld [vmem:[#allocation10 + $0x20] sm:$0xff]
    %v438 = vld [vmem:[#allocation10 + $0x28] sm:$0xff]
    %v439 = vld [vmem:[#allocation10 + $0x30] sm:$0xff]
    %v440 = vld [vmem:[#allocation10 + $0x38] sm:$0xff]
    %v441 = vld [vmem:[#allocation10 + $0x40] sm:$0xff]
    %v442 = vld [vmem:[#allocation10 + $0x48] sm:$0xff]
    %v443 = vld [vmem:[#allocation10 + $0x50] sm:$0xff]
    %v444 = vld [vmem:[#allocation10 + $0x58] sm:$0xff]
    %v445 = vld [vmem:[#allocation10 + $0x60] sm:$0xff]
    %v446 = vld [vmem:[#allocation10 + $0x68] sm:$0xff]
    %v447 = vld [vmem:[#allocation10 + $0x70] sm:$0xff]
    %v448 = vld [vmem:[#allocation10 + $0x78] sm:$0xff]
    %v449 = vld [vmem:[#allocation10 + $0x80] sm:$0xff]
    %v450 = vld [vmem:[#allocation10 + $0x88] sm:$0xff]
    %v451 = vld [vmem:[#allocation10 + $0x90] sm:$0xff]
    %v452 = vld [vmem:[#allocation10 + $0x98] sm:$0xff]
    %v453 = vld [vmem:[#allocation10 + $0xa0] sm:$0xff]
    %v454 = vld [vmem:[#allocation10 + $0xa8] sm:$0xff]
    %v455 = vld [vmem:[#allocation10 + $0xb0] sm:$0xff]
    %v456 = vld [vmem:[#allocation10 + $0xb8] sm:$0xff]
    %v457 = vld [vmem:[#allocation10 + $0xc0] sm:$0xff]
    %v458 = vld [vmem:[#allocation10 + $0xc8] sm:$0xff]
    %v459 = vld [vmem:[#allocation10 + $0xd0] sm:$0xff]
    %v460 = vld [vmem:[#allocation10 + $0xd8] sm:$0xff]
    %v461 = vld [vmem:[#allocation10 + $0xe0] sm:$0xff]
    %v462 = vld [vmem:[#allocation10 + $0xe8] sm:$0xff]
    %v463 = vld [vmem:[#allocation10 + $0xf0] sm:$0xff]
    %v464 = vld [vmem:[#allocation10 + $0xf8] sm:$0xff]
    %v465 = vld [vmem:[#allocation10 + $0x100] sm:$0xff]
    %v466 = vld [vmem:[#allocation10 + $0x108] sm:$0xff]
    %v467 = vld [vmem:[#allocation10 + $0x110] sm:$0xff]
    %v468 = vld [vmem:[#allocation10 + $0x118] sm:$0xff]
    %v469 = vld [vmem:[#allocation10 + $0x120] sm:$0xff]
    %v470 = vld [vmem:[#allocation10 + $0x128] sm:$0xff]
    %v471 = vld [vmem:[#allocation10 + $0x130] sm:$0xff]
    %v472 = vld [vmem:[#allocation10 + $0x138] sm:$0xff]
    %v473 = vld [vmem:[#allocation10 + $0x140] sm:$0xff]
    %v474 = vld [vmem:[#allocation10 + $0x148] sm:$0xff]
    %v475 = vld [vmem:[#allocation10 + $0x150] sm:$0xff]
    %v476 = vld [vmem:[#allocation10 + $0x158] sm:$0xff]
    %v477 = vld [vmem:[#allocation10 + $0x160] sm:$0xff]
    %v478 = vld [vmem:[#allocation10 + $0x168] sm:$0xff]
    %v479 = vld [vmem:[#allocation10 + $0x170] sm:$0xff]
    %v480 = vld [vmem:[#allocation10 + $0x178] sm:$0xff]
    %v481 = vld [vmem:[%s11] sm:$0x1]
    %v483 = vperm.slane %v481, 0
    %485 = vmatpush.msra.mxu0 %v448
    %486 = vmatpush.msra.mxu0 %v447
    %487 = vmatpush.msra.mxu0 %v446
    %488 = vmatpush.msra.mxu0 %v445
    %489 = vmatpush.msra.mxu0 %v444
    %490 = vmatpush.msra.mxu0 %v443
    %491 = vmatpush.msra.mxu0 %v442
    %492 = vmatpush.msra.mxu0 %v441
    %493 = vmatpush.msra.mxu0 %v440
    %494 = vmatpush.msra.mxu0 %v439
    %495 = vmatpush.msra.mxu0 %v438
    %496 = vmatpush.msra.mxu0 %v437
    %497 = vmatpush.msra.mxu0 %v436
    %498 = vmatpush.msra.mxu0 %v435
    %499 = vmatpush.msra.mxu0 %v434
    %500 = vmatpush.msra.mxu0 %v433
    %501 = vmatmul.f32.gmra.mxu0 %v430
    %v502 = vpop.f32.mrf.mxu0
    %v503 = vadd.f32 %v483, %v502
    %504 = vdwg.mxu0
    %505 = vmatpush.msra.mxu0 %v464
    %506 = vmatpush.msra.mxu0 %v463
    %507 = vmatpush.msra.mxu0 %v462
    %508 = vmatpush.msra.mxu0 %v461
    %509 = vmatpush.msra.mxu0 %v460
    %510 = vmatpush.msra.mxu0 %v459
    %511 = vmatpush.msra.mxu0 %v458
    %512 = vmatpush.msra.mxu0 %v457
    %513 = vmatpush.msra.mxu0 %v456
    %514 = vmatpush.msra.mxu0 %v455
    %515 = vmatpush.msra.mxu0 %v454
    %516 = vmatpush.msra.mxu0 %v453
    %517 = vmatpush.msra.mxu0 %v452
    %518 = vmatpush.msra.mxu0 %v451
    %519 = vmatpush.msra.mxu0 %v450
    %520 = vmatpush.msra.mxu0 %v449
    %521 = vmatmul.f32.gmra.mxu0 %v431
    %v522 = vpop.f32.mrf.mxu0
    %v523 = vadd.f32 %v503, %v522
    %524 = vdwg.mxu0
    %525 = vmatpush.msra.mxu0 %v480
    %526 = vmatpush.msra.mxu0 %v479
    %527 = vmatpush.msra.mxu0 %v478
    %528 = vmatpush.msra.mxu0 %v477
    %529 = vmatpush.msra.mxu0 %v476
    %530 = vmatpush.msra.mxu0 %v475
    %531 = vmatpush.msra.mxu0 %v474
    %532 = vmatpush.msra.mxu0 %v473
    %533 = vmatpush.msra.mxu0 %v472
    %534 = vmatpush.msra.mxu0 %v471
    %535 = vmatpush.msra.mxu0 %v470
    %536 = vmatpush.msra.mxu0 %v469
    %537 = vmatpush.msra.mxu0 %v468
    %538 = vmatpush.msra.mxu0 %v467
    %539 = vmatpush.msra.mxu0 %v466
    %540 = vmatpush.msra.mxu0 %v465
    %541 = vmatmul.f32.gmra.mxu0 %v432
    %v542 = vpop.f32.mrf.mxu0
    %v543 = vadd.f32 %v523, %v542
    %544 = vdwg.mxu0
    %545 = vst [vmem:[#allocation14] sm:$0xff] %v543
    // Predicated region
    $region70: #{tpu_custom_call.1} parent=1 // pred_check
      _
    $region71: #{tpu_custom_call.1} parent=1 // pred_check_branch
      %547 = sbr.rel (0) target = $region73
    $region72: #{tpu_custom_call.1} parent=1 // pred_region
      %549 = vsyncadd [#allocation4], 0
      %s551 = sshll.u32 [#allocation11], 4
      %s552 = int_to_ptr.vmem [resolvable:$true] %s551
      %s553 = sshll.u32 %s12, 4
      %s554 = int_to_ptr.hbm [resolvable:$true] %s553
      %556 = dma.vmem_to_hbm [thread:$0]  %s552, 64, %s554, [#allocation4]
    $region73: #{tpu_custom_call.1} parent=1 // pred_fallthru
      _
    // Predicated region
    $region74: #{tpu_custom_call.1} parent=1 // pred_check
      _
    $region75: #{tpu_custom_call.1} parent=1 // pred_check_branch
      %558 = sbr.rel (0) target = $region77
    $region76: #{tpu_custom_call.1} parent=1 // pred_region
      %560 = vsyncadd [#allocation13], 0
      %s562 = sshll.u32 [#allocation12], 4
      %s563 = int_to_ptr.vmem [resolvable:$true] %s562
      %s564 = sshll.u32 %s13, 4
      %s565 = int_to_ptr.hbm [resolvable:$true] %s564
      %567 = dma.vmem_to_hbm [thread:$0]  %s563, 64, %s565, [#allocation13]
    $region77: #{tpu_custom_call.1} parent=1 // pred_fallthru
      _
    // Predicated region
    $region78: #{tpu_custom_call.1} parent=1 // pred_check
      _
    $region79: #{tpu_custom_call.1} parent=1 // pred_check_branch
      %569 = sbr.rel (0) target = $region81
    $region80: #{tpu_custom_call.1} parent=1 // pred_region
      _
    $region81: #{tpu_custom_call.1} parent=1 // pred_fallthru
      _
    // Predicated region
    $region82: #{tpu_custom_call.1} parent=1 // pred_check
      _
    $region83: #{tpu_custom_call.1} parent=1 // pred_check_branch
      %571 = sbr.rel (0) target = $region85
    $region84: #{tpu_custom_call.1} parent=1 // pred_region
      _
    $region85: #{tpu_custom_call.1} parent=1 // pred_fallthru
      _
    // Predicated region
    $region86: #{tpu_custom_call.1} parent=1 // pred_check
      _
    $region87: #{tpu_custom_call.1} parent=1 // pred_check_branch
      %573 = sbr.rel (0) target = $region89
    $region88: #{tpu_custom_call.1} parent=1 // pred_region
      _
    $region89: #{tpu_custom_call.1} parent=1 // pred_fallthru
      _
    // Predicated region
    $region90: #{tpu_custom_call.1} parent=1 // pred_check
      _
    $region91: #{tpu_custom_call.1} parent=1 // pred_check_branch
      %575 = sbr.rel (0) target = $region93
    $region92: #{tpu_custom_call.1} parent=1 // pred_region
      %577 = vsyncadd [#allocation13], 0
      %s579 = sshll.u32 [#allocation14], 4
      %s580 = int_to_ptr.vmem [resolvable:$true] %s579
      %s581 = sshll.u32 %s17, 4
      %s582 = int_to_ptr.hbm [resolvable:$true] %s581
      %584 = dma.vmem_to_hbm [thread:$0]  %s580, 128, %s582, [#allocation13]
    $region93: #{tpu_custom_call.1} parent=1 // pred_fallthru
      _
    // Predicated region
    $region94: #{tpu_custom_call.1} parent=1 // pred_check
      _
    $region95: #{tpu_custom_call.1} parent=1 // pred_check_branch
      %586 = sbr.rel (0) target = $region97
    $region96: #{tpu_custom_call.1} parent=1 // pred_region
      %588 = dma.done [#allocation4], 64
    $region97: #{tpu_custom_call.1} parent=1 // pred_fallthru
      _
    // Predicated region
    $region98: #{tpu_custom_call.1} parent=1 // pred_check
      _
    $region99: #{tpu_custom_call.1} parent=1 // pred_check_branch
      %590 = sbr.rel (0) target = $region101
    $region100: #{tpu_custom_call.1} parent=1 // pred_region
      %592 = dma.done [#allocation13], 64
    $region101: #{tpu_custom_call.1} parent=1 // pred_fallthru
      _
    // Predicated region
    $region102: #{tpu_custom_call.1} parent=1 // pred_check
      _
    $region103: #{tpu_custom_call.1} parent=1 // pred_check_branch
      %594 = sbr.rel (0) target = $region105
    $region104: #{tpu_custom_call.1} parent=1 // pred_region
      _
    $region105: #{tpu_custom_call.1} parent=1 // pred_fallthru
      _
    // Predicated region
    $region106: #{tpu_custom_call.1} parent=1 // pred_check
      _
    $region107: #{tpu_custom_call.1} parent=1 // pred_check_branch
      %596 = sbr.rel (0) target = $region109
    $region108: #{tpu_custom_call.1} parent=1 // pred_region
      _
    $region109: #{tpu_custom_call.1} parent=1 // pred_fallthru
      _
    // Predicated region
    $region110: #{tpu_custom_call.1} parent=1 // pred_check
      _
    $region111: #{tpu_custom_call.1} parent=1 // pred_check_branch
      %598 = sbr.rel (0) target = $region113
    $region112: #{tpu_custom_call.1} parent=1 // pred_region
      _
    $region113: #{tpu_custom_call.1} parent=1 // pred_fallthru
      _
    // Predicated region
    $region114: #{tpu_custom_call.1} parent=1 // pred_check
      _
    $region115: #{tpu_custom_call.1} parent=1 // pred_check_branch
      %600 = sbr.rel (0) target = $region117
    $region116: #{tpu_custom_call.1} parent=1 // pred_region
      %602 = dma.done [#allocation13], 128
    $region117: #{tpu_custom_call.1} parent=1 // pred_fallthru
      _
    %603 = vsyncpa [#allocation3], 1
    %604 = vsyncpa [#allocation6], 1
    %605 = vsyncpa [#allocation9], 1
    %606 = vsyncpa [#allocation4], 1
    %607 = vsyncpa [#allocation13], 1

</llo_original>
